<compile_context>
chip_gen: v7x
topology: tpu7x:2x2x1
jax: 0.10.0
libtpu: 0.0.40
codegen_flags: <defaults>
</compile_context>

<pallas_src>
import jax
import jax.numpy as jnp
from jax.experimental import pallas as pl
from jax.experimental.pallas import tpu as pltpu

_LANE = 128


def _round_up(x, m):
    return (x + m - 1) // m * m


def poly_linear_kernel(x_ref, w_ref, b_ref, o_ref):
    # x_ref: VMEM (D, TILE_N)   -- features along sublanes, batch along lanes
    # w_ref: SMEM (D,)          -- scalar weights
    # b_ref: SMEM (1,)          -- scalar bias
    # o_ref: VMEM (1, TILE_N)   -- lane-dense output
    x = x_ref[...]                                        # one block load
    acc = jnp.full((1, x.shape[1]), b_ref[0], dtype=jnp.float32)
    for d in range(x.shape[0]):                           # D = degree (2-3): unrolled VPU fmas
        acc = acc + w_ref[d] * x[d:d + 1, :]
    o_ref[...] = acc.astype(o_ref.dtype)


def poly_model_forward(x, weight, bias, *, max_tile_n=2048):
    """x: [N, D] f32, weight: [1, D], bias: [1] -> [N, 1] (== nn.Linear(D, 1))."""
    N, D = x.shape

    # Lane-dense tiling of the batch dim: tile is a multiple of 128 lanes,
    # capped at max_tile_n (small enough for v7x's smaller VMEM, D is tiny).
    tile_n = min(_round_up(N, _LANE), _round_up(max_tile_n, _LANE))
    n_pad = _round_up(N, tile_n)
    grid = (n_pad // tile_n,)

    # Layout plumbing in the wrapper: put N on the lane axis, pad to tile.
    xT = jnp.transpose(x)                                 # (D, N)
    if n_pad != N:
        xT = jnp.pad(xT, ((0, 0), (0, n_pad - N)))

    out_1xn = pl.pallas_call(
        poly_linear_kernel,
        out_shape=jax.ShapeDtypeStruct((1, n_pad), x.dtype),
        grid=grid,
        in_specs=[
            pl.BlockSpec((D, tile_n), lambda i: (0, i)),                  # xT tile (VMEM)
            pl.BlockSpec(memory_space=pltpu.MemorySpace.SMEM),            # weight (D,)
            pl.BlockSpec(memory_space=pltpu.MemorySpace.SMEM),            # bias   (1,)
        ],
        out_specs=pl.BlockSpec((1, tile_n), lambda i: (0, i)),
        compiler_params=pltpu.CompilerParams(
            dimension_semantics=("parallel",),
        ),
        cost_estimate=pl.CostEstimate(
            flops=2 * N * D,
            transcendentals=0,
            bytes_accessed=4 * (N * D + D + 1 + N),
        ),
    )(xT, weight.reshape(D), bias.reshape(1))

    # Strip padding and restore the PyTorch output shape [N, 1].
    return out_1xn[0, :N].reshape(N, 1)


if __name__ == "__main__":
    degree = 2
    N = 8  # batch of polynomial feature rows

    key = jax.random.PRNGKey(0)
    kx, kw, kb = jax.random.split(key, 3)

    # Deterministic parameter init (shapes match nn.Linear(degree, 1)).
    bound = 1.0 / (degree ** 0.5)
    weight = jax.random.uniform(kw, (1, degree), jnp.float32, -bound, bound)
    bias = jax.random.uniform(kb, (1,), jnp.float32, -bound, bound)

    x = jax.random.normal(kx, (N, degree), jnp.float32)

    out = jax.block_until_ready(poly_model_forward(x, weight, bias))

    # Sanity check against plain JAX reference.
    ref = x @ weight.T + bias
    assert out.shape == (N, 1)
    assert jnp.allclose(out, ref, atol=1e-5, rtol=1e-5)

    print("KERNEL_OK")
</pallas_src>

<mosaic_0001>
module attributes {stable_mosaic.version = 11 : i64} {
  func.func @poly_linear_kernel(%arg0: i32, %arg1: memref<2x128xf32, #tpu.memory_space<vmem>>, %arg2: memref<2xf32, #tpu.memory_space<smem>>, %arg3: memref<1xf32, #tpu.memory_space<smem>>, %arg4: memref<1x128xf32, #tpu.memory_space<vmem>>) attributes {dimension_semantics = [#tpu.dimension_semantics<parallel>], iteration_bounds = array<i64: 1>, scalar_prefetch = 0 : i64, scratch_operands = 0 : i64, tpu.core_type = #tpu.core_type<tc>, window_params = [{transform_indices = @transform_0, window_bounds = array<i64: 2, 128>}, {transform_indices = @transform_1, window_bounds = array<i64: 2>}, {transform_indices = @transform_2, window_bounds = array<i64: 1>}, {transform_indices = @transform_3, window_bounds = array<i64: 1, 128>}]} {
    %c0 = arith.constant 0 : index
    %c0_0 = arith.constant 0 : index
    %0 = vector.load %arg1[%c0, %c0_0] : memref<2x128xf32, #tpu.memory_space<vmem>>, vector<2x128xf32>
    %c0_1 = arith.constant 0 : index
    %1 = memref.load %arg3[%c0_1] : memref<1xf32, #tpu.memory_space<smem>>
    %2 = vector.broadcast %1 : f32 to vector<1x128xf32>
    %c0_2 = arith.constant 0 : index
    %3 = memref.load %arg2[%c0_2] : memref<2xf32, #tpu.memory_space<smem>>
    %4 = vector.extract_strided_slice %0 {offsets = [0, 0], sizes = [1, 128], strides = [1, 1]} : vector<2x128xf32> to vector<1x128xf32>
    %5 = vector.broadcast %3 : f32 to vector<1x128xf32>
    %6 = arith.mulf %5, %4 : vector<1x128xf32>
    %7 = arith.addf %2, %6 : vector<1x128xf32>
    %c1 = arith.constant 1 : index
    %8 = memref.load %arg2[%c1] : memref<2xf32, #tpu.memory_space<smem>>
    %9 = vector.extract_strided_slice %0 {offsets = [1, 0], sizes = [1, 128], strides = [1, 1]} : vector<2x128xf32> to vector<1x128xf32>
    %10 = vector.broadcast %8 : f32 to vector<1x128xf32>
    %11 = arith.mulf %10, %9 : vector<1x128xf32>
    %12 = arith.addf %7, %11 : vector<1x128xf32>
    %c0_3 = arith.constant 0 : index
    %c0_4 = arith.constant 0 : index
    %13 = vector.load %arg4[%c0_3, %c0_4] : memref<1x128xf32, #tpu.memory_space<vmem>>, vector<1x128xf32>
    tpu.vector_store %arg4[%c0_3, %c0_4], %12 {strides = array<i32>} : memref<1x128xf32, #tpu.memory_space<vmem>>, vector<1x128xf32>,
    return
  }
  func.func @transform_0(%arg0: i32) -> (i32, i32) {
    %c0_i32 = arith.constant 0 : i32
    %c0_i32_0 = arith.constant 0 : i32
    return %c0_i32, %arg0 : i32, i32
  }
  func.func @transform_1(%arg0: i32) -> i32 {
    %c0_i32 = arith.constant 0 : i32
    %c0_i32_0 = arith.constant 0 : i32
    return %c0_i32 : i32
  }
  func.func @transform_2(%arg0: i32) -> i32 {
    %c0_i32 = arith.constant 0 : i32
    %c0_i32_0 = arith.constant 0 : i32
    return %c0_i32 : i32
  }
  func.func @transform_3(%arg0: i32) -> (i32, i32) {
    %c0_i32 = arith.constant 0 : i32
    %c0_i32_0 = arith.constant 0 : i32
    return %c0_i32, %arg0 : i32, i32
  }
}

</mosaic_0001>

<llo_original>
// kernel: tpu_custom_call.1
$region0: #{tpu_custom_call.1}
  #allocation0 [shape = 'u32[]', space=smem, size = 0x4, offset = 0x4, fixed_abs, tag = 'smem constant byte address 0x4 - core index']
  #allocation1 [shape = 'u32[144,128]{1,0:T(1,128)}', space=vmem, size = 0x12000, scoped, tag = 'internal scratch']
  #allocation2 [shape = 'f32[1]{0:T(128)S(6)}', space=smem, size = 0x200, scoped, tag = 'scoped memory for tpu_custom_call.1']
  %s0 = inlined_call_operand.vmem [shape: f32[2,128], index: 0, kind: input, shape index: {}]
  %s1 = inlined_call_operand.vmem [shape: f32[2], index: 1, kind: input, shape index: {}]
  %s2 = inlined_call_operand.<no memory space> [shape: f32[1], index: 2, kind: input, shape index: {}]
  %s3 = inlined_call_operand.hbm [shape: f32[1,128], index: 3, kind: output, shape index: {}]
  %s4 = sld [smem:[#allocation0]]
  $region26: #{tpu_custom_call.1} parent=0
    _
  %s6 = ssub.s32 1, %s4
  %s7 = scalar_select 0, %s6, %s4
  %8 = sst [smem:[#allocation2]] %s2
  $region1: #{tpu_custom_call.1} parent=0
    #allocation3 [shape = 'u8[512]{0}', space=smem, size = 0x200, scoped, tag = 'input window, operand 1, single buffered']
    #allocation4 [shape = 's32[1]{0}', space=sflag, size = 0x4, scoped, tag = 'scoped memory for tpu_custom_call.1']
    #allocation5 [shape = 's32[1]{0}', space=sflag, size = 0x4, scoped, tag = 'scoped memory for tpu_custom_call.1']
    #allocation6 [shape = 'u8[512]{0}', space=vmem, size = 0x400, scoped, tag = 'output window, operand 0, single buffered']
    %9 = vsyncpa [#allocation5], 0
    %10 = vsyncpa [#allocation4], 0
    // Predicated region
    $region2: #{tpu_custom_call.1} parent=1 // pred_check
      _
    $region3: #{tpu_custom_call.1} parent=1 // pred_check_branch
      %12 = sbr.rel (0) target = $region5
    $region4: #{tpu_custom_call.1} parent=1 // pred_region
      _
    $region5: #{tpu_custom_call.1} parent=1 // pred_fallthru
      _
    // Predicated region
    $region6: #{tpu_custom_call.1} parent=1 // pred_check
      _
    $region7: #{tpu_custom_call.1} parent=1 // pred_check_branch
      %14 = sbr.rel (0) target = $region9
    $region8: #{tpu_custom_call.1} parent=1 // pred_region
      %s16 = ssub.s32 16, 16
      %17 = vsyncadd [#allocation5], %s16
      %s19 = sshll.u32 %s1, 4
      %s20 = int_to_ptr.vmem [resolvable:$true] %s19
      %22 = dma.vmem_to_smem %s20, 16, [#allocation3], [#allocation5]
    $region9: #{tpu_custom_call.1} parent=1 // pred_fallthru
      _
    // Predicated region
    $region10: #{tpu_custom_call.1} parent=1 // pred_check
      _
    $region11: #{tpu_custom_call.1} parent=1 // pred_check_branch
      %24 = sbr.rel (0) target = $region13
    $region12: #{tpu_custom_call.1} parent=1 // pred_region
      _
    $region13: #{tpu_custom_call.1} parent=1 // pred_fallthru
      _
    // Predicated region
    $region14: #{tpu_custom_call.1} parent=1 // pred_check
      _
    $region15: #{tpu_custom_call.1} parent=1 // pred_check_branch
      %26 = sbr.rel (0) target = $region17
    $region16: #{tpu_custom_call.1} parent=1 // pred_region
      %27 = dma.done [#allocation5], 16
    $region17: #{tpu_custom_call.1} parent=1 // pred_fallthru
      _
    %28 = sfence
    %v29 = vld [vmem:[%s0] sm:$0x3]
    %s30 = sld [smem:[#allocation2]]
    %v31 = vstv %s30
    %s32 = sld [smem:[#allocation3]]
    %v33 = vstv %s32
    %v34 = vmul.f32 %v33, %v29
    %v35 = vadd.f32 %v31, %v34
    %s36 = sld [smem:[#allocation3 + $0x1]]
    %v37 = vstv %s36
    %v38 = vmul.f32 %v37, %v29
    %v40 = vrot.slane %v38, 1
    %v42 = vadd.f32 %v35, %v40
    %43 = vst [vmem:[#allocation6] sm:$0x1] %v42
    // Predicated region
    $region18: #{tpu_custom_call.1} parent=1 // pred_check
      _
    $region19: #{tpu_custom_call.1} parent=1 // pred_check_branch
      %45 = sbr.rel (0) target = $region21
    $region20: #{tpu_custom_call.1} parent=1 // pred_region
      %s47 = ssub.s32 16, 16
      %48 = vsyncadd [#allocation4], %s47
      %s50 = sshll.u32 [#allocation6], 4
      %s51 = int_to_ptr.vmem [resolvable:$true] %s50
      %53 = dma.vmem_to_hbm [thread:$0]  %s51, 16, %s3, [#allocation4]
    $region21: #{tpu_custom_call.1} parent=1 // pred_fallthru
      _
    // Predicated region
    $region22: #{tpu_custom_call.1} parent=1 // pred_check
      _
    $region23: #{tpu_custom_call.1} parent=1 // pred_check_branch
      %55 = sbr.rel (0) target = $region25
    $region24: #{tpu_custom_call.1} parent=1 // pred_region
      %56 = dma.done [#allocation4], 16
    $region25: #{tpu_custom_call.1} parent=1 // pred_fallthru
      _
    %57 = vsyncpa [#allocation4], 1
    %58 = vsyncpa [#allocation5], 1

</llo_original>
